<compile_context>
chip_gen: v7x
topology: tpu7x:2x2x1
jax: 0.10.0
libtpu: 0.0.40
codegen_flags: <defaults>
</compile_context>

<pallas_src>
import functools

import jax
import jax.numpy as jnp
from jax.experimental import pallas as pl
from jax.experimental.pallas import tpu as pltpu


def _round_up(x, m):
    return ((x + m - 1) // m) * m


def gated_cnn_classify_kernel(xc_ref, wconv_ref, wcls_ref, bcls_ref, out_ref,
                              *, hidden_size):
    """One row tile per grid step.

    xc_ref    : (TR, K*H)   bf16  im2col rows (K shifted views lane-concatenated)
    wconv_ref : (K*H, 2*H)  bf16  fused conv|gate weight
    wcls_ref  : (H, O_pad)  bf16  classifier weight (transposed, lane-padded)
    bcls_ref  : (1, O_pad)  f32   classifier bias (lane-padded)
    out_ref   : (TR, O_pad) f32   logits
    """
    # Single MXU contraction for both conv branches (f32 accumulation).
    ab = jnp.dot(xc_ref[...], wconv_ref[...],
                 preferred_element_type=jnp.float32)        # (TR, 2H) f32
    a = ab[:, :hidden_size]
    b = ab[:, hidden_size:]
    gated = a * jax.nn.sigmoid(b)                           # GatedCNN, f32

    logits = jnp.dot(gated.astype(wcls_ref.dtype), wcls_ref[...],
                     preferred_element_type=jnp.float32)    # (TR, O_pad) f32
    out_ref[...] = (logits + bcls_ref[...]).astype(out_ref.dtype)


def torch_model_forward(token_ids, params, *, kernel_size):
    """token_ids: (B, L) int32. Returns y_pred (B, L, output_size) float32."""
    emb = params["emb"]          # (vocab+2, H) f32, row 0 is zeros (padding_idx=0)
    wc = params["wc"]            # (K, H, H)  conv weight, (tap, in, out)
    wg = params["wg"]            # (K, H, H)  gate conv weight
    wcls = params["wcls"]        # (H, O)     classifier weight (transposed)
    bcls = params["bcls"]        # (1, O)     classifier bias

    K = kernel_size
    # PyTorch Conv1d with padding=(K-1)//2 only gives "same" length for odd K.
    assert K % 2 == 1, "gated_cnn path only matches PyTorch for odd kernel_size"

    B, L = token_ids.shape
    H = emb.shape[-1]
    O = wcls.shape[-1]
    pad = (K - 1) // 2

    # ---- glue in plain JAX (bf16 to halve HBM traffic) -----------------------
    # TODO(synk): embedding gather could be fused into the kernel via scalar
    # prefetch of token_ids to avoid the (B, L, H) HBM round trip.
    x = jnp.take(emb.astype(jnp.bfloat16), token_ids, axis=0)      # (B, L, H)
    xpad = jnp.pad(x, ((0, 0), (pad, pad), (0, 0)))                # (B, L+K-1, H)

    # im2col: lane-concatenate the K shifted views -> (B*L, K*H) rows.
    cols = [xpad[:, k:k + L, :] for k in range(K)]
    xc = jnp.concatenate(cols, axis=-1).reshape(B * L, K * H)      # (B*L, K*H)

    # Fused conv|gate weight: (K, H, 2H) -> (K*H, 2H), matching im2col ordering.
    wconv = jnp.concatenate([wc, wg], axis=-1).reshape(K * H, 2 * H)
    wconv = wconv.astype(jnp.bfloat16)

    # Lane-dense classifier: pad output channels to a multiple of 128.
    O_pad = _round_up(max(O, 128), 128)
    wcls_p = jnp.zeros((H, O_pad), jnp.bfloat16).at[:, :O].set(
        wcls.astype(jnp.bfloat16))
    bcls_p = jnp.zeros((1, O_pad), jnp.float32).at[:, :O].set(bcls)

    # Row tiling over B*L (multiple batch elements per grid step).
    N = B * L
    TR = min(512, _round_up(N, 8))
    N_pad = _round_up(N, TR)
    if N_pad != N:
        xc = jnp.pad(xc, ((0, N_pad - N), (0, 0)))

    kernel = functools.partial(gated_cnn_classify_kernel, hidden_size=H)

    out = pl.pallas_call(
        kernel,
        out_shape=jax.ShapeDtypeStruct((N_pad, O_pad), jnp.float32),
        grid_spec=pltpu.PrefetchScalarGridSpec(
            num_scalar_prefetch=0,
            grid=(N_pad // TR,),
            in_specs=[
                pl.BlockSpec((TR, K * H), lambda r: (r, 0)),       # im2col rows
                pl.BlockSpec((K * H, 2 * H), lambda r: (0, 0)),    # fused conv wt
                pl.BlockSpec((H, O_pad), lambda r: (0, 0)),        # classifier wt
                pl.BlockSpec((1, O_pad), lambda r: (0, 0)),        # classifier bias
            ],
            out_specs=pl.BlockSpec((TR, O_pad), lambda r: (r, 0)),
        ),
        compiler_params=pltpu.CompilerParams(
            dimension_semantics=("parallel",),
            vmem_limit_bytes=64 << 20),
    )(xc, wconv, wcls_p, bcls_p)

    return out[:N, :O].reshape(B, L, O)


def reference_forward(token_ids, params, *, kernel_size):
    """Pure-JAX f32 reference mirroring the PyTorch forward."""
    emb, wc, wg, wcls, bcls = (params["emb"], params["wc"], params["wg"],
                               params["wcls"], params["bcls"])
    K = kernel_size
    pad = (K - 1) // 2
    x = jnp.take(emb, token_ids, axis=0)                # (B, L, H)
    xpad = jnp.pad(x, ((0, 0), (pad, pad), (0, 0)))
    L = x.shape[1]

    def conv(xp, w):  # w: (K, H, H) in->out
        out = jnp.zeros_like(x)
        for k in range(K):
            out = out + jnp.einsum("blh,ho->blo", xp[:, k:k + L, :], w[k])
        return out

    a = conv(xpad, wc)
    b = jax.nn.sigmoid(conv(xpad, wg))
    g = a * b
    return jnp.einsum("blh,ho->blo", g, wcls) + bcls[0]


def init_params(key, *, vocab_size, hidden_size, output_size, kernel_size):
    # nn.Embedding(vocab_size + 1 + 1, hidden_size, padding_idx=0)
    n_emb_rows = vocab_size + 2
    k_emb, k_wc, k_wg, k_wcls, k_bcls = jax.random.split(key, 5)
    emb = 0.02 * jax.random.normal(k_emb, (n_emb_rows, hidden_size), jnp.float32)
    emb = emb.at[0].set(0.0)  # padding_idx=0
    # Conv1d weights in PyTorch are (out_ch, in_ch, K); we store (K, in_ch, out_ch).
    wc = 0.1 * jax.random.normal(
        k_wc, (kernel_size, hidden_size, hidden_size), jnp.float32)
    wg = 0.1 * jax.random.normal(
        k_wg, (kernel_size, hidden_size, hidden_size), jnp.float32)
    # Linear(hidden, output): stored transposed as (H, O).
    wcls = 0.1 * jax.random.normal(
        k_wcls, (hidden_size, output_size), jnp.float32)
    bcls = 0.01 * jax.random.normal(k_bcls, (1, output_size), jnp.float32)
    return {"emb": emb, "wc": wc, "wg": wg, "wcls": wcls, "bcls": bcls}


if __name__ == "__main__":
    config = dict(hidden_size=32, vocab_size=30, output_size=8,
                  kernel_size=3, model_type="gated_cnn", num_layers=1,
                  use_crf=False, pooling_style="max")
    B, L = 2, 8

    key = jax.random.PRNGKey(0)
    k_params, k_ids = jax.random.split(key)
    params = init_params(k_params,
                         vocab_size=config["vocab_size"],
                         hidden_size=config["hidden_size"],
                         output_size=config["output_size"],
                         kernel_size=config["kernel_size"])
    token_ids = jax.random.randint(
        k_ids, (B, L), 0, config["vocab_size"] + 2, dtype=jnp.int32)

    y_pred = torch_model_forward(token_ids, params,
                                 kernel_size=config["kernel_size"])
    y_pred = jax.block_until_ready(y_pred)

    y_ref = reference_forward(token_ids, params,
                              kernel_size=config["kernel_size"])
    assert y_pred.shape == (B, L, config["output_size"])
    # bf16 inputs with f32 accumulation -> looser tolerance than pure f32.
    assert jnp.allclose(y_pred, y_ref, atol=5e-3, rtol=5e-2), (
        float(jnp.max(jnp.abs(y_pred - y_ref))))

    # TODO(synk): CRF decode / training-loss branches (y is not None,
    # use_crf=True) are sequential dynamic-programming ops, not implemented.
    print("KERNEL_OK")
</pallas_src>

<mosaic_0001>
module attributes {stable_mosaic.version = 11 : i64} {
  func.func @gated_cnn_classify_kernel(%arg0: i32, %arg1: memref<16x96xbf16, #tpu.memory_space<vmem>>, %arg2: memref<96x64xbf16, #tpu.memory_space<vmem>>, %arg3: memref<32x128xbf16, #tpu.memory_space<vmem>>, %arg4: memref<1x128xf32, #tpu.memory_space<vmem>>, %arg5: memref<16x128xf32, #tpu.memory_space<vmem>>) attributes {dimension_semantics = [#tpu.dimension_semantics<parallel>], iteration_bounds = array<i64: 1>, scalar_prefetch = 0 : i64, scratch_operands = 0 : i64, tpu.core_type = #tpu.core_type<tc>, window_params = [{transform_indices = @transform_0, window_bounds = array<i64: 16, 96>}, {pipeline_mode = #tpu.pipeline_mode<synchronous>, transform_indices = @transform_1, window_bounds = array<i64: 96, 64>}, {pipeline_mode = #tpu.pipeline_mode<synchronous>, transform_indices = @transform_2, window_bounds = array<i64: 32, 128>}, {pipeline_mode = #tpu.pipeline_mode<synchronous>, transform_indices = @transform_3, window_bounds = array<i64: 1, 128>}, {transform_indices = @transform_4, window_bounds = array<i64: 16, 128>}]} {
    %c0 = arith.constant 0 : index
    %c0_0 = arith.constant 0 : index
    %0 = vector.load %arg1[%c0, %c0_0] : memref<16x96xbf16, #tpu.memory_space<vmem>>, vector<16x96xbf16>
    %c0_1 = arith.constant 0 : index
    %c0_2 = arith.constant 0 : index
    %1 = vector.load %arg2[%c0_1, %c0_2] : memref<96x64xbf16, #tpu.memory_space<vmem>>, vector<96x64xbf16>
    %cst = arith.constant dense<0.000000e+00> : vector<16x64xf32>
    %2 = tpu.matmul %0, %1, %cst {dimension_numbers = #tpu.dot_dimension_numbers<[1], [0], [0], [1], [0, 0, 1, 1], [], []>} : vector<16x96xbf16>, vector<96x64xbf16>, vector<16x64xf32> -> vector<16x64xf32>
    %3 = vector.extract_strided_slice %2 {offsets = [0, 0], sizes = [16, 32], strides = [1, 1]} : vector<16x64xf32> to vector<16x32xf32>
    %4 = vector.extract_strided_slice %2 {offsets = [0, 32], sizes = [16, 32], strides = [1, 1]} : vector<16x64xf32> to vector<16x32xf32>
    %5 = arith.negf %4 : vector<16x32xf32>
    %6 = math.exp %5 : vector<16x32xf32>
    %cst_3 = arith.constant 1.000000e+00 : f32
    %7 = vector.broadcast %cst_3 : f32 to vector<16x32xf32>
    %8 = arith.addf %7, %6 : vector<16x32xf32>
    %9 = arith.divf %7, %8 : vector<16x32xf32>
    %10 = arith.mulf %3, %9 : vector<16x32xf32>
    %11 = arith.truncf %10 : vector<16x32xf32> to vector<16x32xbf16>
    %c0_4 = arith.constant 0 : index
    %c0_5 = arith.constant 0 : index
    %12 = vector.load %arg3[%c0_4, %c0_5] : memref<32x128xbf16, #tpu.memory_space<vmem>>, vector<32x128xbf16>
    %cst_6 = arith.constant dense<0.000000e+00> : vector<16x128xf32>
    %13 = tpu.matmul %11, %12, %cst_6 {dimension_numbers = #tpu.dot_dimension_numbers<[1], [0], [0], [1], [0, 0, 1, 1], [], []>} : vector<16x32xbf16>, vector<32x128xbf16>, vector<16x128xf32> -> vector<16x128xf32>
    %c0_7 = arith.constant 0 : index
    %c0_8 = arith.constant 0 : index
    %14 = vector.load %arg4[%c0_7, %c0_8] : memref<1x128xf32, #tpu.memory_space<vmem>>, vector<1x128xf32>
    %15 = vector.broadcast %14 : vector<1x128xf32> to vector<16x128xf32>
    %16 = arith.addf %13, %15 : vector<16x128xf32>
    %c0_9 = arith.constant 0 : index
    %c0_10 = arith.constant 0 : index
    %17 = vector.load %arg5[%c0_9, %c0_10] : memref<16x128xf32, #tpu.memory_space<vmem>>, vector<16x128xf32>
    tpu.vector_store %arg5[%c0_9, %c0_10], %16 {strides = array<i32>} : memref<16x128xf32, #tpu.memory_space<vmem>>, vector<16x128xf32>,
    return
  }
  func.func @transform_0(%arg0: i32) -> (i32, i32) {
    %c0_i32 = arith.constant 0 : i32
    %c0_i32_0 = arith.constant 0 : i32
    return %arg0, %c0_i32 : i32, i32
  }
  func.func @transform_1(%arg0: i32) -> (i32, i32) {
    %c0_i32 = arith.constant 0 : i32
    %c0_i32_0 = arith.constant 0 : i32
    %c0_i32_1 = arith.constant 0 : i32
    return %c0_i32, %c0_i32_0 : i32, i32
  }
  func.func @transform_2(%arg0: i32) -> (i32, i32) {
    %c0_i32 = arith.constant 0 : i32
    %c0_i32_0 = arith.constant 0 : i32
    %c0_i32_1 = arith.constant 0 : i32
    return %c0_i32, %c0_i32_0 : i32, i32
  }
  func.func @transform_3(%arg0: i32) -> (i32, i32) {
    %c0_i32 = arith.constant 0 : i32
    %c0_i32_0 = arith.constant 0 : i32
    %c0_i32_1 = arith.constant 0 : i32
    return %c0_i32, %c0_i32_0 : i32, i32
  }
  func.func @transform_4(%arg0: i32) -> (i32, i32) {
    %c0_i32 = arith.constant 0 : i32
    %c0_i32_0 = arith.constant 0 : i32
    return %arg0, %c0_i32 : i32, i32
  }
}

</mosaic_0001>

<llo_original>
// kernel: tpu_custom_call.1
$region0: #{tpu_custom_call.1}
  #allocation0 [shape = 'u32[]', space=smem, size = 0x4, offset = 0x4, fixed_abs, tag = 'smem constant byte address 0x4 - core index']
  #allocation1 [shape = 'u32[144,128]{1,0:T(1,128)}', space=vmem, size = 0x12000, scoped, tag = 'internal scratch']
  %s0 = inlined_call_operand.hbm [shape: bf16[16,96], index: 0, kind: input, shape index: {}]
  %s1 = inlined_call_operand.hbm [shape: bf16[96,64], index: 1, kind: input, shape index: {}]
  %s2 = inlined_call_operand.hbm [shape: bf16[32,128], index: 2, kind: input, shape index: {}]
  %s3 = inlined_call_operand.hbm [shape: f32[1,128], index: 3, kind: input, shape index: {}]
  %s4 = inlined_call_operand.hbm [shape: f32[16,128], index: 4, kind: output, shape index: {}]
  %s5 = sld [smem:[#allocation0]]
  $region42: #{tpu_custom_call.1} parent=0
    _
  %s7 = ssub.s32 1, %s5
  %s8 = scalar_select 0, %s7, %s5
  $region1: #{tpu_custom_call.1} parent=0
    #allocation2 [shape = 'u8[4096]{0}', space=vmem, size = 0x1000, scoped, tag = 'input window, operand 0, single buffered']
    #allocation3 [shape = 's32[1]{0}', space=sflag, size = 0x4, scoped, tag = 'scoped memory for tpu_custom_call.1']
    #allocation4 [shape = 's32[1]{0}', space=sflag, size = 0x4, scoped, tag = 'scoped memory for tpu_custom_call.1']
    #allocation5 [shape = 'u8[24576]{0}', space=vmem, size = 0x6000, scoped, tag = 'input window, operand 1, single buffered']
    #allocation6 [shape = 's32[1]{0}', space=sflag, size = 0x4, scoped, tag = 'scoped memory for tpu_custom_call.1']
    #allocation7 [shape = 'u8[8192]{0}', space=vmem, size = 0x2000, scoped, tag = 'input window, operand 2, single buffered']
    #allocation8 [shape = 'u8[512]{0}', space=vmem, size = 0x400, scoped, tag = 'input window, operand 3, single buffered']
    #allocation9 [shape = 's32[1]{0}', space=sflag, size = 0x4, scoped, tag = 'scoped memory for tpu_custom_call.1']
    #allocation10 [shape = 'u8[8192]{0}', space=vmem, size = 0x2000, scoped, tag = 'output window, operand 0, single buffered']
    %9 = vsyncpa [#allocation3], 0
    %10 = vsyncpa [#allocation6], 0
    %11 = vsyncpa [#allocation9], 0
    %12 = vsyncpa [#allocation4], 0
    // Predicated region
    $region2: #{tpu_custom_call.1} parent=1 // pred_check
      _
    $region3: #{tpu_custom_call.1} parent=1 // pred_check_branch
      %14 = sbr.rel (0) target = $region5
    $region4: #{tpu_custom_call.1} parent=1 // pred_region
      %s16 = ssub.s32 128, 128
      %17 = vsyncadd [#allocation3], %s16
      %s18 = sshll.u32 [#allocation2], 4
      %s19 = int_to_ptr.vmem [resolvable:$true] %s18
      %24 = dma.hbm_to_vmem [thread:$0]  %s0, 128, %s19, [#allocation3], 64, 64, 4
    $region5: #{tpu_custom_call.1} parent=1 // pred_fallthru
      _
    // Predicated region
    $region6: #{tpu_custom_call.1} parent=1 // pred_check
      _
    $region7: #{tpu_custom_call.1} parent=1 // pred_check_branch
      %26 = sbr.rel (0) target = $region9
    $region8: #{tpu_custom_call.1} parent=1 // pred_region
      %s28 = ssub.s32 768, 768
      %29 = vsyncadd [#allocation6], %s28
      %s30 = sshll.u32 [#allocation5], 4
      %s31 = int_to_ptr.vmem [resolvable:$true] %s30
      %36 = dma.hbm_to_vmem [thread:$0]  %s1, 768, %s31, [#allocation6], 64, 64, 4
    $region9: #{tpu_custom_call.1} parent=1 // pred_fallthru
      _
    // Predicated region
    $region10: #{tpu_custom_call.1} parent=1 // pred_check
      _
    $region11: #{tpu_custom_call.1} parent=1 // pred_check_branch
      %38 = sbr.rel (0) target = $region13
    $region12: #{tpu_custom_call.1} parent=1 // pred_region
      %s40 = ssub.s32 256, 256
      %41 = vsyncadd [#allocation6], %s40
      %s42 = sshll.u32 [#allocation7], 4
      %s43 = int_to_ptr.vmem [resolvable:$true] %s42
      %48 = dma.hbm_to_vmem [thread:$0]  %s2, 256, %s43, [#allocation6], 64, 64, 4
    $region13: #{tpu_custom_call.1} parent=1 // pred_fallthru
      _
    // Predicated region
    $region14: #{tpu_custom_call.1} parent=1 // pred_check
      _
    $region15: #{tpu_custom_call.1} parent=1 // pred_check_branch
      %50 = sbr.rel (0) target = $region17
    $region16: #{tpu_custom_call.1} parent=1 // pred_region
      %s52 = ssub.s32 16, 16
      %53 = vsyncadd [#allocation9], %s52
      %s55 = sshll.u32 [#allocation8], 4
      %s56 = int_to_ptr.vmem [resolvable:$true] %s55
      %58 = dma.hbm_to_vmem [thread:$0]  %s3, 16, %s56, [#allocation9]
    $region17: #{tpu_custom_call.1} parent=1 // pred_fallthru
      _
    // Predicated region
    $region18: #{tpu_custom_call.1} parent=1 // pred_check
      _
    $region19: #{tpu_custom_call.1} parent=1 // pred_check_branch
      %60 = sbr.rel (0) target = $region21
    $region20: #{tpu_custom_call.1} parent=1 // pred_region
      %61 = dma.done [#allocation3], 128
    $region21: #{tpu_custom_call.1} parent=1 // pred_fallthru
      _
    // Predicated region
    $region22: #{tpu_custom_call.1} parent=1 // pred_check
      _
    $region23: #{tpu_custom_call.1} parent=1 // pred_check_branch
      %63 = sbr.rel (0) target = $region25
    $region24: #{tpu_custom_call.1} parent=1 // pred_region
      %64 = dma.done [#allocation6], 768
    $region25: #{tpu_custom_call.1} parent=1 // pred_fallthru
      _
    // Predicated region
    $region26: #{tpu_custom_call.1} parent=1 // pred_check
      _
    $region27: #{tpu_custom_call.1} parent=1 // pred_check_branch
      %66 = sbr.rel (0) target = $region29
    $region28: #{tpu_custom_call.1} parent=1 // pred_region
      %67 = dma.done [#allocation6], 256
    $region29: #{tpu_custom_call.1} parent=1 // pred_fallthru
      _
    // Predicated region
    $region30: #{tpu_custom_call.1} parent=1 // pred_check
      _
    $region31: #{tpu_custom_call.1} parent=1 // pred_check_branch
      %69 = sbr.rel (0) target = $region33
    $region32: #{tpu_custom_call.1} parent=1 // pred_region
      %70 = dma.done [#allocation9], 16
    $region33: #{tpu_custom_call.1} parent=1 // pred_fallthru
      _
    %v72 = vld [vmem:[#allocation2] sm:$0xf]
    %v73 = vld [vmem:[#allocation2 + $0x4] sm:$0xf]
    %v74 = vld [vmem:[#allocation5] sm:$0xf]
    %v75 = vld [vmem:[#allocation5 + $0x4] sm:$0xf]
    %v76 = vld [vmem:[#allocation5 + $0x8] sm:$0xf]
    %v77 = vld [vmem:[#allocation5 + $0xc] sm:$0xf]
    %v78 = vld [vmem:[#allocation5 + $0x10] sm:$0xf]
    %v79 = vld [vmem:[#allocation5 + $0x14] sm:$0xf]
    %v80 = vld [vmem:[#allocation5 + $0x18] sm:$0xf]
    %v81 = vld [vmem:[#allocation5 + $0x1c] sm:$0xf]
    %v82 = vld [vmem:[#allocation5 + $0x20] sm:$0xf]
    %v83 = vld [vmem:[#allocation5 + $0x24] sm:$0xf]
    %v84 = vld [vmem:[#allocation5 + $0x28] sm:$0xf]
    %v85 = vld [vmem:[#allocation5 + $0x2c] sm:$0xf]
    %v88 = vunpack.c.l.b16 %v72
    %v89 = vunpack.c.l.b16 %v73
    %v90 = vpack.c.b16 %v89, %v88
    %v103 = vunpack.c.l.b16 %v74
    %v104 = vunpack.c.l.b16 %v75
    %v105 = vunpack.c.l.b16 %v76
    %v106 = vunpack.c.l.b16 %v77
    %v107 = vunpack.c.l.b16 %v78
    %v108 = vunpack.c.l.b16 %v79
    %v109 = vunpack.c.l.b16 %v80
    %v110 = vunpack.c.l.b16 %v81
    %v111 = vunpack.c.l.b16 %v82
    %v112 = vunpack.c.l.b16 %v83
    %v113 = vunpack.c.l.b16 %v84
    %v114 = vunpack.c.l.b16 %v85
    %v115 = vpack.c.b16 %v104, %v103
    %v116 = vpack.c.b16 %v106, %v105
    %v117 = vpack.c.b16 %v108, %v107
    %v118 = vpack.c.b16 %v110, %v109
    %v119 = vpack.c.b16 %v112, %v111
    %v120 = vpack.c.b16 %v114, %v113
    %vm127 = vcmask 785408
    %v129 = vsel %vm127, %v90, 0
    %131 = vmatprep.subr.bf16.mxu0 0
    %132 = vmatpush1.bf16.msra.mxu0 %v115
    %133 = vmatprep.subr.bf16.mxu0 0
    %134 = vmatpush1.bf16.msra.mxu0 %v116
    %135 = vmatprep.subr.bf16.mxu0 0
    %136 = vmatpush1.bf16.msra.mxu0 %v117
    %137 = vmatprep.subr.bf16.mxu0 0
    %138 = vmatpush1.bf16.msra.mxu0 %v118
    %139 = vmatprep.subr.bf16.mxu0 0
    %140 = vmatpush1.bf16.msra.mxu0 %v119
    %141 = vmatprep.subr.bf16.mxu0 0
    %142 = vmatpush1.bf16.msra.mxu0 %v120
    %143 = vmatprep.subr.bf16.mxu0 0
    %144 = vmatpush1.bf16.msra.mxu0 0
    %145 = vmatprep.subr.bf16.mxu0 0
    %146 = vmatpush1.bf16.msra.mxu0 0
    %147 = vmatprep.subr.bf16.mxu0 0
    %148 = vmatpush1.bf16.msra.mxu0 0
    %149 = vmatprep.subr.bf16.mxu0 0
    %150 = vmatpush1.bf16.msra.mxu0 0
    %151 = vmatprep.subr.bf16.mxu0 0
    %152 = vmatpush1.bf16.msra.mxu0 0
    %153 = vmatprep.subr.bf16.mxu0 0
    %154 = vmatpush1.bf16.msra.mxu0 0
    %155 = vmatprep.subr.bf16.mxu0 0
    %156 = vmatpush1.bf16.msra.mxu0 0
    %157 = vmatprep.subr.bf16.mxu0 0
    %158 = vmatpush1.bf16.msra.mxu0 0
    %159 = vmatprep.subr.bf16.mxu0 0
    %160 = vmatpush1.bf16.msra.mxu0 0
    %161 = vmatprep.subr.bf16.mxu0 0
    %162 = vmatpush1.bf16.msra.mxu0 0
    %163 = vmatprep.mubr.bf16.mxu0 0
    %164 = vmatmul.mubr.bf16.gmra.mrb[0].mxu0 %v129
    %v165 = vpop.f32.mrb[0].mxu0
    %v166 = vadd.f32 0.0, %v165
    %v167 = vpop.f32.mrb[0].mxu0
    %v168 = vpop.f32.mrb[0].mxu0
    %v169 = vadd.f32 0.0, %v168
    %v170 = vpop.f32.mrb[0].mxu0
    %171 = vdwg.mxu0
    %v172 = vxor.u32 %v166, 2147483648
    %v173 = vxor.u32 %v169, 2147483648
    %v174 = vmul.f32 %v172, 1.442695
    %v175 = vpow.pop %v174
    %v176 = vmul.f32 %v173, 1.442695
    %v177 = vpow.pop %v176
    %v178 = vadd.f32 %v175, 1.0
    %v179 = vadd.f32 %v177, 1.0
    %v180 = vrcp.pop %v178
    %v181 = vmul.f32 1.0, %v180
    %v182 = vrcp.pop %v179
    %v183 = vmul.f32 1.0, %v182
    %186 = vrot.lane.b32.xlu0 %v181, 96
    %v187 = vpop.permute.xlu0 %186
    %188 = vrot.lane.b32.xlu0 %v183, 96
    %v189 = vpop.permute.xlu0 %188
    %v192 = vmul.f32 %v166, %v187
    %v193 = vmul.f32 %v169, %v189
    %v194 = vpack.c.bf16 %v193, %v192
    %v195 = vld [vmem:[#allocation7] sm:$0xf]
    %v196 = vld [vmem:[#allocation7 + $0x4] sm:$0xf]
    %v197 = vld [vmem:[#allocation7 + $0x8] sm:$0xf]
    %v198 = vld [vmem:[#allocation7 + $0xc] sm:$0xf]
    %v199 = vld [vmem:[#allocation8] sm:$0x1]
    %v201 = vlaneseq
    %v202 = vshrl.u32 %v201, 7
    %v203 = vsub.s32 0, %v202
    %v204 = vrot.slane %v199, %v203
    %v210 = vunpack.c.l.b16 %v195
    %v211 = vunpack.c.l.b16 %v196
    %v212 = vunpack.c.l.b16 %v197
    %v213 = vunpack.c.l.b16 %v198
    %v214 = vpack.c.b16 %v211, %v210
    %v215 = vpack.c.b16 %v213, %v212
    %vm218 = vcmask 261120
    %v220 = vsel %vm218, %v194, 0
    %222 = vmatprep.subr.bf16.mxu0 0
    %223 = vmatpush1.bf16.msra.mxu0 %v214
    %224 = vmatprep.subr.bf16.mxu0 0
    %225 = vmatpush1.bf16.msra.mxu0 %v215
    %226 = vmatprep.subr.bf16.mxu0 0
    %227 = vmatpush1.bf16.msra.mxu0 0
    %228 = vmatprep.subr.bf16.mxu0 0
    %229 = vmatpush1.bf16.msra.mxu0 0
    %230 = vmatprep.subr.bf16.mxu0 0
    %231 = vmatpush1.bf16.msra.mxu0 0
    %232 = vmatprep.subr.bf16.mxu0 0
    %233 = vmatpush1.bf16.msra.mxu0 0
    %234 = vmatprep.subr.bf16.mxu0 0
    %235 = vmatpush1.bf16.msra.mxu0 0
    %236 = vmatprep.subr.bf16.mxu0 0
    %237 = vmatpush1.bf16.msra.mxu0 0
    %238 = vmatprep.subr.bf16.mxu0 0
    %239 = vmatpush1.bf16.msra.mxu0 0
    %240 = vmatprep.subr.bf16.mxu0 0
    %241 = vmatpush1.bf16.msra.mxu0 0
    %242 = vmatprep.subr.bf16.mxu0 0
    %243 = vmatpush1.bf16.msra.mxu0 0
    %244 = vmatprep.subr.bf16.mxu0 0
    %245 = vmatpush1.bf16.msra.mxu0 0
    %246 = vmatprep.subr.bf16.mxu0 0
    %247 = vmatpush1.bf16.msra.mxu0 0
    %248 = vmatprep.subr.bf16.mxu0 0
    %249 = vmatpush1.bf16.msra.mxu0 0
    %250 = vmatprep.subr.bf16.mxu0 0
    %251 = vmatpush1.bf16.msra.mxu0 0
    %252 = vmatprep.subr.bf16.mxu0 0
    %253 = vmatpush1.bf16.msra.mxu0 0
    %254 = vmatprep.mubr.bf16.mxu0 0
    %255 = vmatmul.mubr.bf16.gmra.mrb[0].mxu0 %v220
    %v256 = vpop.f32.mrb[0].mxu0
    %v257 = vadd.f32 %v204, %v256
    %v258 = vpop.f32.mrb[0].mxu0
    %v259 = vpop.f32.mrb[0].mxu0
    %v260 = vadd.f32 %v204, %v259
    %v261 = vpop.f32.mrb[0].mxu0
    %262 = vdwg.mxu0
    %263 = vst [vmem:[#allocation10] sm:$0xff] %v257
    %264 = vst [vmem:[#allocation10 + $0x8] sm:$0xff] %v260
    // Predicated region
    $region34: #{tpu_custom_call.1} parent=1 // pred_check
      _
    $region35: #{tpu_custom_call.1} parent=1 // pred_check_branch
      %266 = sbr.rel (0) target = $region37
    $region36: #{tpu_custom_call.1} parent=1 // pred_region
      %s268 = ssub.s32 256, 256
      %269 = vsyncadd [#allocation4], %s268
      %s270 = sshll.u32 [#allocation10], 4
      %s271 = int_to_ptr.vmem [resolvable:$true] %s270
      %276 = dma.vmem_to_hbm [thread:$0]  %s271, 256, %s4, [#allocation4], 128, 128, 8
    $region37: #{tpu_custom_call.1} parent=1 // pred_fallthru
      _
    // Predicated region
    $region38: #{tpu_custom_call.1} parent=1 // pred_check
      _
    $region39: #{tpu_custom_call.1} parent=1 // pred_check_branch
      %278 = sbr.rel (0) target = $region41
    $region40: #{tpu_custom_call.1} parent=1 // pred_region
      %279 = dma.done [#allocation4], 256
    $region41: #{tpu_custom_call.1} parent=1 // pred_fallthru
      _
    %280 = vsyncpa [#allocation3], 1
    %281 = vsyncpa [#allocation6], 1
    %282 = vsyncpa [#allocation9], 1
    %283 = vsyncpa [#allocation4], 1

</llo_original>
